<compile_context>
chip_gen: v7x
topology: tpu7x:2x2x1
jax: 0.10.0
libtpu: 0.0.40
codegen_flags: <defaults>
</compile_context>

<pallas_src>
import functools

import jax
import jax.numpy as jnp
from jax.experimental import pallas as pl
from jax.experimental.pallas import tpu as pltpu


def _round_up(x, m):
    return ((x + m - 1) // m) * m


def _predictive_kernel(*refs, sigma, has_eps, k_tiled):
    """One (sample-tile, N-tile) block of predictive draws.

    refs (in order): w_ref (TS, TK), xt_ref (TK, TN), [eps_ref (TS, TN)],
                     o_ref (TS, TN).
    The bias is folded into the contraction (ones row in X^T, extra column in
    W).  When k_tiled, the f32 output block itself is the accumulator (its
    BlockSpec is invariant in the k axis).
    """
    if has_eps:
        w_ref, xt_ref, eps_ref, o_ref = refs
    else:
        w_ref, xt_ref, o_ref = refs
        eps_ref = None

    part = jnp.dot(w_ref[...], xt_ref[...], preferred_element_type=jnp.float32)

    if not k_tiled:
        # Specialized 2-D grid: single dot + fused noise + store.
        if has_eps:
            part = part + jnp.float32(sigma) * eps_ref[...]
        o_ref[...] = part.astype(o_ref.dtype)
    else:
        k = pl.program_id(2)

        @pl.when(k == 0)
        def _():
            if has_eps:
                o_ref[...] = part + jnp.float32(sigma) * eps_ref[...]
            else:
                o_ref[...] = part

        @pl.when(k != 0)
        def _():
            o_ref[...] = o_ref[...] + part


def predictive_obs(w_samples, b_samples, x, *, sigma, rng_key=None,
                   tile_s=512, tile_n=1024, max_tile_k=512,
                   compute_dtype=jnp.float32):
    """Vectorized predictive distribution over the `obs` site.

    w_samples: (S, D) f32   b_samples: (S, 1) f32   x: (N, D) f32
    rng_key  : jax PRNG key for the likelihood noise (required if sigma != 0)
    returns  : (S, N) f32,  obs[s] = X @ w[s] + b[s] + sigma * eps[s]
    """
    w_samples = jnp.asarray(w_samples, jnp.float32)
    b_samples = jnp.asarray(b_samples, jnp.float32).reshape(-1, 1)
    x = jnp.asarray(x, jnp.float32)
    S, D = w_samples.shape
    N = x.shape[0]
    K = D + 1  # bias folded in as one extra contraction column
    sigma = float(sigma)
    has_eps = sigma != 0.0
    if has_eps and rng_key is None:
        raise ValueError("rng_key is required when sigma != 0")

    # ---- tiling (lane-dense output, MXU-friendly sample tile) --------------
    tile_s = min(_round_up(tile_s, 8), _round_up(S, 8))
    tile_n = min(_round_up(tile_n, 128), _round_up(N, 128))
    S_pad = _round_up(S, tile_s)
    N_pad = _round_up(N, tile_n)

    if K <= max_tile_k:                  # common case: no K tiling
        Kp = _round_up(K, 8)
        tile_k = Kp
        k_tiled = False
    else:                                # pad K to a 128 multiple, tile_k | Kp
        Kp = _round_up(K, 128)
        cap = max(128, (max_tile_k // 128) * 128)
        tile_k = 128
        for cand in range(min(cap, Kp), 0, -128):
            if Kp % cand == 0:
                tile_k = cand
                break
        k_tiled = Kp > tile_k
        if not k_tiled:
            tile_k = Kp

    # ---- one-time wrapper-side augmentation / transpose / padding ----------
    w_aug = jnp.concatenate([w_samples, b_samples], axis=1)               # (S, K)
    w_aug = jnp.pad(w_aug, ((0, S_pad - S), (0, Kp - K))).astype(compute_dtype)
    xt_aug = jnp.concatenate([x.T, jnp.ones((1, N), x.dtype)], axis=0)    # (K, N)
    xt_aug = jnp.pad(xt_aug, ((0, Kp - K), (0, N_pad - N))).astype(compute_dtype)

    inputs = [w_aug, xt_aug]
    if has_eps:
        eps = jax.random.normal(rng_key, (S, N), dtype=jnp.float32)
        eps = jnp.pad(eps, ((0, S_pad - S), (0, N_pad - N)))
        inputs.append(eps)

    # ---- grid & block specs -------------------------------------------------
    if k_tiled:
        grid = (S_pad // tile_s, N_pad // tile_n, Kp // tile_k)
        in_specs = [
            pl.BlockSpec((tile_s, tile_k), lambda i, j, k: (i, k)),   # W
            pl.BlockSpec((tile_k, tile_n), lambda i, j, k: (k, j)),   # X^T
        ]
        if has_eps:
            in_specs.append(pl.BlockSpec((tile_s, tile_n), lambda i, j, k: (i, j)))
        out_spec = pl.BlockSpec((tile_s, tile_n), lambda i, j, k: (i, j))
        dim_sem = ("parallel", "parallel", "arbitrary")
    else:
        grid = (S_pad // tile_s, N_pad // tile_n)
        in_specs = [
            pl.BlockSpec((tile_s, Kp), lambda i, j: (i, 0)),          # W
            pl.BlockSpec((Kp, tile_n), lambda i, j: (0, j)),          # X^T
        ]
        if has_eps:
            in_specs.append(pl.BlockSpec((tile_s, tile_n), lambda i, j: (i, j)))
        out_spec = pl.BlockSpec((tile_s, tile_n), lambda i, j: (i, j))
        dim_sem = ("parallel", "parallel")

    kernel = functools.partial(
        _predictive_kernel, sigma=sigma, has_eps=has_eps, k_tiled=k_tiled)

    # ---- scheduling hints / VMEM budget (sized for v7x's 64 MiB too) -------
    itemsize = jnp.dtype(compute_dtype).itemsize
    vmem_need = (2 * tile_s * tile_k * itemsize        # double-buffered W tiles
                 + 2 * tile_k * tile_n * itemsize      # double-buffered X^T tiles
                 + 2 * tile_s * tile_n * 4             # output (resident over k)
                 + (2 * tile_s * tile_n * 4 if has_eps else 0))
    vmem_limit = int(min(40 * 1024 * 1024, max(16 * 1024 * 1024, 2 * vmem_need)))
    cost = pl.CostEstimate(
        flops=int(2 * S_pad * N_pad * Kp),
        transcendentals=0,
        bytes_accessed=int(
            itemsize * ((N_pad // tile_n) * S_pad * Kp
                        + (S_pad // tile_s) * Kp * N_pad)
            + 4 * S_pad * N_pad * (2 if has_eps else 1)),
    )

    out_pad = pl.pallas_call(
        kernel,
        out_shape=jax.ShapeDtypeStruct((S_pad, N_pad), jnp.float32),
        grid=grid,
        in_specs=in_specs,
        out_specs=out_spec,
        compiler_params=pltpu.CompilerParams(
            dimension_semantics=dim_sem,
            vmem_limit_bytes=vmem_limit,
        ),
        cost_estimate=cost,
    )(*inputs)

    return out_pad[:S, :N]


class Predictive:
    """JAX/Pallas analogue of pyro.infer.Predictive for the linear-regression
    model above.  Returns a dict of predictive samples for sites not present
    in `posterior_samples` (here: just "obs")."""

    def __init__(self, posterior_samples, *, sigma=0.1, num_samples=None,
                 return_sites=(), parallel=True):
        batch_sizes = {v.shape[0] for v in posterior_samples.values()}
        assert len(batch_sizes) == 1, "inconsistent leading sample dims"
        inferred = batch_sizes.pop()
        if num_samples is not None and num_samples != inferred:
            num_samples = inferred  # Pyro warns and defaults to the batch size
        self.num_samples = inferred
        self.posterior_samples = posterior_samples
        self.sigma = float(sigma)
        self.return_sites = return_sites
        self.parallel = parallel  # kernel path is inherently vectorized

    def forward(self, x, rng_key):
        obs = predictive_obs(
            self.posterior_samples["w"],
            self.posterior_samples["b"],
            x,
            sigma=self.sigma,
            rng_key=rng_key,
        )
        # Default Pyro behavior: only return sample sites NOT in posterior_samples.
        return {"obs": obs}

    __call__ = forward


if __name__ == "__main__":
    key = jax.random.PRNGKey(0)
    k_w, k_b, k_x, k_pred = jax.random.split(key, 4)

    S, N, D = 16, 16, 32          # num_samples, data points, features
    sigma = 0.1

    # Deterministic "posterior samples" (stand-in for MCMC/guide output).
    w_samples = jax.random.normal(k_w, (S, D), dtype=jnp.float32)
    b_samples = jax.random.normal(k_b, (S, 1), dtype=jnp.float32)
    x = jax.random.normal(k_x, (N, D), dtype=jnp.float32)

    mu_ref = jnp.einsum("sd,nd->sn", w_samples, x) + b_samples

    # 1) Deterministic path (sigma = 0): folded-bias matmul, 2-D grid.
    mu_kernel = predictive_obs(w_samples, b_samples, x, sigma=0.0)
    mu_kernel = jax.block_until_ready(mu_kernel)
    assert mu_kernel.shape == (S, N) and mu_kernel.dtype == jnp.float32
    assert jnp.allclose(mu_kernel, mu_ref, atol=1e-2, rtol=1e-3)

    # 2) Stochastic predictive draw — noise comes from jax.random.normal in
    #    the wrapper, so the result is exactly reproducible.
    predictive = Predictive(
        {"w": w_samples, "b": b_samples}, sigma=sigma, parallel=True
    )
    out = predictive(x, k_pred)
    obs = jax.block_until_ready(out["obs"])
    assert obs.shape == (S, N) and obs.dtype == jnp.float32
    eps_ref_arr = jax.random.normal(k_pred, (S, N), dtype=jnp.float32)
    assert jnp.allclose(obs, mu_ref + sigma * eps_ref_arr, atol=1e-2, rtol=1e-3)

    # 3) K-tiled reduction path (3-D grid, output-resident accumulation).
    S2, N2, D2 = 24, 40, 300
    k_w2, k_b2, k_x2 = jax.random.split(jax.random.PRNGKey(1), 3)
    w2 = jax.random.normal(k_w2, (S2, D2), dtype=jnp.float32)
    b2 = jax.random.normal(k_b2, (S2, 1), dtype=jnp.float32)
    x2 = jax.random.normal(k_x2, (N2, D2), dtype=jnp.float32)
    mu2_ref = jnp.einsum("sd,nd->sn", w2, x2) + b2
    mu2 = jax.block_until_ready(
        predictive_obs(w2, b2, x2, sigma=0.0, max_tile_k=128)
    )
    assert mu2.shape == (S2, N2)
    assert jnp.allclose(mu2, mu2_ref, atol=5e-2, rtol=1e-3)

    print("KERNEL_OK")
</pallas_src>

<mosaic_0001>
module attributes {stable_mosaic.version = 11 : i64} {
  func.func @_predictive_kernel(%arg0: i32, %arg1: i32, %arg2: memref<16x40xf32, #tpu.memory_space<vmem>>, %arg3: memref<40x128xf32, #tpu.memory_space<vmem>>, %arg4: memref<16x128xf32, #tpu.memory_space<vmem>>) attributes {dimension_semantics = [#tpu.dimension_semantics<parallel>, #tpu.dimension_semantics<parallel>], iteration_bounds = array<i64: 1, 1>, scalar_prefetch = 0 : i64, scratch_operands = 0 : i64, tpu.core_type = #tpu.core_type<tc>, window_params = [{transform_indices = @transform_0, window_bounds = array<i64: 16, 40>}, {transform_indices = @transform_1, window_bounds = array<i64: 40, 128>}, {transform_indices = @transform_2, window_bounds = array<i64: 16, 128>}]} {
    %c0 = arith.constant 0 : index
    %c0_0 = arith.constant 0 : index
    %0 = vector.load %arg2[%c0, %c0_0] : memref<16x40xf32, #tpu.memory_space<vmem>>, vector<16x40xf32>
    %c0_1 = arith.constant 0 : index
    %c0_2 = arith.constant 0 : index
    %1 = vector.load %arg3[%c0_1, %c0_2] : memref<40x128xf32, #tpu.memory_space<vmem>>, vector<40x128xf32>
    %cst = arith.constant dense<0.000000e+00> : vector<16x128xf32>
    %2 = tpu.matmul %0, %1, %cst {dimension_numbers = #tpu.dot_dimension_numbers<[1], [0], [0], [1], [0, 0, 1, 1], [], []>} : vector<16x40xf32>, vector<40x128xf32>, vector<16x128xf32> -> vector<16x128xf32>
    %c0_3 = arith.constant 0 : index
    %c0_4 = arith.constant 0 : index
    %3 = vector.load %arg4[%c0_3, %c0_4] : memref<16x128xf32, #tpu.memory_space<vmem>>, vector<16x128xf32>
    tpu.vector_store %arg4[%c0_3, %c0_4], %2 {strides = array<i32>} : memref<16x128xf32, #tpu.memory_space<vmem>>, vector<16x128xf32>,
    return
  }
  func.func @transform_0(%arg0: i32, %arg1: i32) -> (i32, i32) {
    %c0_i32 = arith.constant 0 : i32
    %c0_i32_0 = arith.constant 0 : i32
    return %arg0, %c0_i32 : i32, i32
  }
  func.func @transform_1(%arg0: i32, %arg1: i32) -> (i32, i32) {
    %c0_i32 = arith.constant 0 : i32
    %c0_i32_0 = arith.constant 0 : i32
    return %c0_i32, %arg1 : i32, i32
  }
  func.func @transform_2(%arg0: i32, %arg1: i32) -> (i32, i32) {
    %c0_i32 = arith.constant 0 : i32
    return %arg0, %arg1 : i32, i32
  }
}

</mosaic_0001>

<llo_original>
// kernel: tpu_custom_call.1
$region0: #{tpu_custom_call.1}
  #allocation0 [shape = 'u32[]', space=smem, size = 0x4, offset = 0x4, fixed_abs, tag = 'smem constant byte address 0x4 - core index']
  #allocation1 [shape = 'u32[144,128]{1,0:T(1,128)}', space=vmem, size = 0x12000, scoped, tag = 'internal scratch']
  %s0 = inlined_call_operand.hbm [shape: f32[16,40], index: 0, kind: input, shape index: {}]
  %s1 = inlined_call_operand.hbm [shape: f32[40,128], index: 1, kind: input, shape index: {}]
  %s2 = inlined_call_operand.hbm [shape: f32[16,128], index: 2, kind: output, shape index: {}]
  %s3 = sld [smem:[#allocation0]]
  $region26: #{tpu_custom_call.1} parent=0
    _
  %s5 = ssub.s32 1, %s3
  %s6 = scalar_select 0, %s5, %s3
  $region1: #{tpu_custom_call.1} parent=0
    #allocation2 [shape = 'u8[8192]{0}', space=vmem, size = 0x2000, scoped, tag = 'input window, operand 0, single buffered']
    #allocation3 [shape = 's32[1]{0}', space=sflag, size = 0x4, scoped, tag = 'scoped memory for tpu_custom_call.1']
    #allocation4 [shape = 's32[1]{0}', space=sflag, size = 0x4, scoped, tag = 'scoped memory for tpu_custom_call.1']
    #allocation5 [shape = 'u8[20480]{0}', space=vmem, size = 0x5000, scoped, tag = 'input window, operand 1, single buffered']
    #allocation6 [shape = 's32[1]{0}', space=sflag, size = 0x4, scoped, tag = 'scoped memory for tpu_custom_call.1']
    #allocation7 [shape = 'u8[8192]{0}', space=vmem, size = 0x2000, scoped, tag = 'output window, operand 0, single buffered']
    %7 = vsyncpa [#allocation3], 0
    %8 = vsyncpa [#allocation6], 0
    %9 = vsyncpa [#allocation4], 0
    // Predicated region
    $region2: #{tpu_custom_call.1} parent=1 // pred_check
      _
    $region3: #{tpu_custom_call.1} parent=1 // pred_check_branch
      %11 = sbr.rel (0) target = $region5
    $region4: #{tpu_custom_call.1} parent=1 // pred_region
      %s13 = ssub.s32 256, 256
      %14 = vsyncadd [#allocation3], %s13
      %s15 = sshll.u32 [#allocation2], 4
      %s16 = int_to_ptr.vmem [resolvable:$true] %s15
      %21 = dma.hbm_to_vmem [thread:$0]  %s0, 256, %s16, [#allocation3], 128, 128, 8
    $region5: #{tpu_custom_call.1} parent=1 // pred_fallthru
      _
    // Predicated region
    $region6: #{tpu_custom_call.1} parent=1 // pred_check
      _
    $region7: #{tpu_custom_call.1} parent=1 // pred_check_branch
      %23 = sbr.rel (0) target = $region9
    $region8: #{tpu_custom_call.1} parent=1 // pred_region
      %s25 = ssub.s32 640, 640
      %26 = vsyncadd [#allocation6], %s25
      %s27 = sshll.u32 [#allocation5], 4
      %s28 = int_to_ptr.vmem [resolvable:$true] %s27
      %33 = dma.hbm_to_vmem [thread:$0]  %s1, 640, %s28, [#allocation6], 128, 128, 8
    $region9: #{tpu_custom_call.1} parent=1 // pred_fallthru
      _
    // Predicated region
    $region10: #{tpu_custom_call.1} parent=1 // pred_check
      _
    $region11: #{tpu_custom_call.1} parent=1 // pred_check_branch
      %35 = sbr.rel (0) target = $region13
    $region12: #{tpu_custom_call.1} parent=1 // pred_region
      %36 = dma.done [#allocation3], 256
    $region13: #{tpu_custom_call.1} parent=1 // pred_fallthru
      _
    // Predicated region
    $region14: #{tpu_custom_call.1} parent=1 // pred_check
      _
    $region15: #{tpu_custom_call.1} parent=1 // pred_check_branch
      %38 = sbr.rel (0) target = $region17
    $region16: #{tpu_custom_call.1} parent=1 // pred_region
      %39 = dma.done [#allocation6], 640
    $region17: #{tpu_custom_call.1} parent=1 // pred_fallthru
      _
    %v40 = vld [vmem:[#allocation2] sm:$0xff]
    %v41 = vld [vmem:[#allocation2 + $0x8] sm:$0xff]
    %v42 = vld [vmem:[#allocation5] sm:$0xff]
    %v43 = vld [vmem:[#allocation5 + $0x8] sm:$0xff]
    %v44 = vld [vmem:[#allocation5 + $0x10] sm:$0xff]
    %v45 = vld [vmem:[#allocation5 + $0x18] sm:$0xff]
    %v46 = vld [vmem:[#allocation5 + $0x20] sm:$0xff]
    %vm47 = vcmask 326656
    %v49 = vsel %vm47, %v40, 0
    %v52 = vsel %vm47, %v41, 0
    %54 = vmatprep.subr.mxu0 0.0
    %55 = vmatpush1.msra.mxu0 %v42
    %56 = vmatprep.subr.mxu0 0.0
    %57 = vmatpush1.msra.mxu0 %v43
    %58 = vmatprep.subr.mxu0 0.0
    %59 = vmatpush1.msra.mxu0 %v44
    %60 = vmatprep.subr.mxu0 0.0
    %61 = vmatpush1.msra.mxu0 %v45
    %62 = vmatprep.subr.mxu0 0.0
    %63 = vmatpush1.msra.mxu0 %v46
    %64 = vmatprep.subr.mxu0 0.0
    %65 = vmatpush1.msra.mxu0 0.0
    %66 = vmatprep.subr.mxu0 0.0
    %67 = vmatpush1.msra.mxu0 0.0
    %68 = vmatprep.subr.mxu0 0.0
    %69 = vmatpush1.msra.mxu0 0.0
    %70 = vmatprep.subr.mxu0 0.0
    %71 = vmatpush1.msra.mxu0 0.0
    %72 = vmatprep.subr.mxu0 0.0
    %73 = vmatpush1.msra.mxu0 0.0
    %74 = vmatprep.subr.mxu0 0.0
    %75 = vmatpush1.msra.mxu0 0.0
    %76 = vmatprep.subr.mxu0 0.0
    %77 = vmatpush1.msra.mxu0 0.0
    %78 = vmatprep.subr.mxu0 0.0
    %79 = vmatpush1.msra.mxu0 0.0
    %80 = vmatprep.subr.mxu0 0.0
    %81 = vmatpush1.msra.mxu0 0.0
    %82 = vmatprep.subr.mxu0 0.0
    %83 = vmatpush1.msra.mxu0 0.0
    %84 = vmatprep.subr.mxu0 0.0
    %85 = vmatpush1.msra.mxu0 0.0
    %86 = vmatprep.subr.mxu0 0.0
    %87 = vmatpush1.msra.mxu0 0.0
    %88 = vmatprep.subr.mxu0 0.0
    %89 = vmatpush1.msra.mxu0 0.0
    %90 = vmatprep.subr.mxu0 0.0
    %91 = vmatpush1.msra.mxu0 0.0
    %92 = vmatprep.subr.mxu0 0.0
    %93 = vmatpush1.msra.mxu0 0.0
    %94 = vmatprep.subr.mxu0 0.0
    %95 = vmatpush1.msra.mxu0 0.0
    %96 = vmatprep.subr.mxu0 0.0
    %97 = vmatpush1.msra.mxu0 0.0
    %98 = vmatprep.subr.mxu0 0.0
    %99 = vmatpush1.msra.mxu0 0.0
    %100 = vmatprep.subr.mxu0 0.0
    %101 = vmatpush1.msra.mxu0 0.0
    %102 = vmatprep.subr.mxu0 0.0
    %103 = vmatpush1.msra.mxu0 0.0
    %104 = vmatprep.subr.mxu0 0.0
    %105 = vmatpush1.msra.mxu0 0.0
    %106 = vmatprep.subr.mxu0 0.0
    %107 = vmatpush1.msra.mxu0 0.0
    %108 = vmatprep.subr.mxu0 0.0
    %109 = vmatpush1.msra.mxu0 0.0
    %110 = vmatprep.subr.mxu0 0.0
    %111 = vmatpush1.msra.mxu0 0.0
    %112 = vmatprep.subr.mxu0 0.0
    %113 = vmatpush1.msra.mxu0 0.0
    %114 = vmatprep.subr.mxu0 0.0
    %115 = vmatpush1.msra.mxu0 0.0
    %116 = vmatprep.subr.mxu0 0.0
    %117 = vmatpush1.msra.mxu0 0.0
    %118 = vmatprep.mubr.f32.mxu0 0.0
    %119 = vmatmul.mubr.f32.gmra.mrb[0].mxu0 %v49
    %v120 = vpop.f32.mrb[0].mxu0
    %v121 = vadd.f32 0.0, %v120
    %v122 = vpop.f32.mrb[0].mxu0
    %123 = vmatprep.mubr.f32.mxu0 0.0
    %124 = vmatmul.mubr.f32.gmra.mrb[0].mxu0 %v52
    %v125 = vpop.f32.mrb[0].mxu0
    %v126 = vadd.f32 0.0, %v125
    %v127 = vpop.f32.mrb[0].mxu0
    %128 = vdwg.mxu0
    %129 = vst [vmem:[#allocation7] sm:$0xff] %v121
    %130 = vst [vmem:[#allocation7 + $0x8] sm:$0xff] %v126
    // Predicated region
    $region18: #{tpu_custom_call.1} parent=1 // pred_check
      _
    $region19: #{tpu_custom_call.1} parent=1 // pred_check_branch
      %132 = sbr.rel (0) target = $region21
    $region20: #{tpu_custom_call.1} parent=1 // pred_region
      %s134 = ssub.s32 256, 256
      %135 = vsyncadd [#allocation4], %s134
      %s136 = sshll.u32 [#allocation7], 4
      %s137 = int_to_ptr.vmem [resolvable:$true] %s136
      %142 = dma.vmem_to_hbm [thread:$0]  %s137, 256, %s2, [#allocation4], 128, 128, 8
    $region21: #{tpu_custom_call.1} parent=1 // pred_fallthru
      _
    // Predicated region
    $region22: #{tpu_custom_call.1} parent=1 // pred_check
      _
    $region23: #{tpu_custom_call.1} parent=1 // pred_check_branch
      %144 = sbr.rel (0) target = $region25
    $region24: #{tpu_custom_call.1} parent=1 // pred_region
      %145 = dma.done [#allocation4], 256
    $region25: #{tpu_custom_call.1} parent=1 // pred_fallthru
      _
    %146 = vsyncpa [#allocation3], 1
    %147 = vsyncpa [#allocation6], 1
    %148 = vsyncpa [#allocation4], 1

</llo_original>
